<compile_context>
chip_gen: v6e
topology: v6e:2x2x1
jax: 0.10.0
libtpu: 0.0.40
codegen_flags: <defaults>
</compile_context>

<pallas_src>
import functools

import jax
import jax.numpy as jnp
from jax.experimental import pallas as pl
from jax.experimental.pallas import tpu as pltpu

BN_EPS = 1e-5


# ---------------------------------------------------------------------------
# Shared math (works on both Pallas Refs and plain jnp arrays: both support
# `[...]`, `.shape`, and static slices), so kernel and matched reference are
# numerically identical.
# ---------------------------------------------------------------------------
def _layer(h, w_ref, gamma, beta, *, mxu_dtype, relu):
    """Linear (no bias) -> training-mode BN (fused scale/shift) -> optional ReLU."""
    w = w_ref[...]                                   # read at point of use
    z = jnp.dot(h.astype(mxu_dtype), w, preferred_element_type=jnp.float32)
    # Single-pass BN stats: two independent reductions (overlap on XLU),
    # var = E[z^2] - mean^2 in f32, clamped at 0 to guard against cancellation.
    mean = jnp.mean(z, axis=0, keepdims=True)
    msq = jnp.mean(z * z, axis=0, keepdims=True)
    var = jnp.maximum(msq - mean * mean, 0.0)
    s = gamma * jax.lax.rsqrt(var + BN_EPS)          # fused scale
    t = beta - mean * s                              # fused shift
    y = z * s + t
    return jnp.maximum(y, 0.0) if relu else y


def _basic_block_x_compute(x, w1, w2, w3, w4, gb_ref, *, mxu_dtype, input_size):
    """Both bottlenecks fused: layer1 = concat weights, layers 2-4 = block-diag.

    gb_ref: (2, sum(widths)) f32, row0 = gamma, row1 = beta, layers concatenated
    along the lane dim in order (so it is read with one load + static slices).
    """
    widths = (w1.shape[1], w2.shape[1], w3.shape[1], w4.shape[1])
    offs = (0,
            widths[0],
            widths[0] + widths[1],
            widths[0] + widths[1] + widths[2])
    gb = gb_ref[...]                                 # single (2, total) load

    def gamma_beta(layer):
        o, wd = offs[layer], widths[layer]
        return gb[0:1, o:o + wd], gb[1:2, o:o + wd]

    h = _layer(x, w1, *gamma_beta(0), mxu_dtype=mxu_dtype, relu=True)   # (B, 2H)
    h = _layer(h, w2, *gamma_beta(1), mxu_dtype=mxu_dtype, relu=True)   # (B, 2H)
    h = _layer(h, w3, *gamma_beta(2), mxu_dtype=mxu_dtype, relu=True)   # (B, 2H)
    y = _layer(h, w4, *gamma_beta(3), mxu_dtype=mxu_dtype, relu=False)  # (B, 2F)

    # TODO(synk): on v6e/v7x (256-wide MXU) w4 could be repacked so block 2's
    # columns start at lane 128, making these slices vreg-aligned; skipped so
    # the same packing stays optimal on v5e (128-wide MXU).
    out1 = jnp.maximum(y[:, :input_size] + x, 0.0)   # residual inside each block
    out2 = jnp.maximum(y[:, input_size:] + x, 0.0)
    return jnp.maximum(out1 + out2 + x, 0.0)         # BasicBlockX combine


def _basic_block_x_kernel(x_ref, w1, w2, w3, w4, gb_ref, out_ref,
                          *, mxu_dtype, input_size):
    x = x_ref[...]
    out = _basic_block_x_compute(x, w1, w2, w3, w4, gb_ref,
                                 mxu_dtype=mxu_dtype, input_size=input_size)
    out_ref[...] = out.astype(out_ref.dtype)


# ---------------------------------------------------------------------------
# Parameter packing (host side)
# ---------------------------------------------------------------------------
def _block_diag(a, b):
    m, n = a.shape
    p, q = b.shape
    top = jnp.concatenate([a, jnp.zeros((m, q), a.dtype)], axis=1)
    bot = jnp.concatenate([jnp.zeros((p, n), b.dtype), b], axis=1)
    return jnp.concatenate([top, bot], axis=0)


def pack_basic_block_x_params(p1, p2, mxu_dtype):
    """p_i: list of 4 layers, each (W (in,out), b (out,), gamma (out,), beta (out,)).

    Linear biases are intentionally dropped: training-mode BatchNorm subtracts
    the batch mean, which cancels any per-feature constant bias exactly.
    (Only valid for training-mode / batch statistics -- do not reuse for
    eval-mode running-stats BN.)

    Returns (W1_cat, W2_bd, W3_bd, W4_bd, gb_all) where gb_all is a single
    (2, sum(widths)) f32 array: row0 = gamma, row1 = beta, layers concatenated.
    """
    def cat_gb(layer):
        g = jnp.concatenate([p1[layer][2], p2[layer][2]])
        b = jnp.concatenate([p1[layer][3], p2[layer][3]])
        return jnp.stack([g, b], axis=0)                                  # (2, width)

    w1 = jnp.concatenate([p1[0][0], p2[0][0]], axis=1).astype(mxu_dtype)  # (F, 2H)
    w2 = _block_diag(p1[1][0], p2[1][0]).astype(mxu_dtype)                # (2H, 2H)
    w3 = _block_diag(p1[2][0], p2[2][0]).astype(mxu_dtype)                # (2H, 2H)
    w4 = _block_diag(p1[3][0], p2[3][0]).astype(mxu_dtype)                # (2H, 2F)
    gb_all = jnp.concatenate([cat_gb(l) for l in range(4)],
                             axis=1).astype(jnp.float32)                  # (2, 6H+2F)
    return w1, w2, w3, w4, gb_all


def basic_block_x(x, params1, params2, mxu_dtype=jnp.bfloat16):
    """x: (B, input_size) f32; params_i: 4 layers of (W, b, gamma, beta)."""
    B, F = x.shape
    assert B > 1, "training-mode BatchNorm needs batch size > 1"
    packed = pack_basic_block_x_params(params1, params2, mxu_dtype)
    w1, w2, w3, w4, gb_all = packed

    vmem = pl.BlockSpec(memory_space=pltpu.MemorySpace.VMEM)
    flops = 2 * B * sum(int(w.shape[0]) * int(w.shape[1]) for w in (w1, w2, w3, w4))
    transcendentals = sum(int(w.shape[1]) for w in (w1, w2, w3, w4))      # rsqrt per BN feature
    io_bytes = sum(int(a.size) * a.dtype.itemsize for a in (x, *packed))
    io_bytes += B * F * 4                                                  # output

    # Right-sized VMEM budget: live buffers here total < ~128 KiB; keep generous
    # headroom for compiler scratch while documenting the real footprint.
    act_bytes = B * 8 * int(w2.shape[1]) * 4           # rough live-activation bound
    vmem_limit = max(1 << 20, 16 * (io_bytes + act_bytes))

    return pl.pallas_call(
        functools.partial(_basic_block_x_kernel, mxu_dtype=mxu_dtype, input_size=F),
        out_shape=jax.ShapeDtypeStruct((B, F), jnp.float32),
        in_specs=[vmem] * 6,
        out_specs=vmem,
        compiler_params=pltpu.CompilerParams(vmem_limit_bytes=int(vmem_limit)),
        cost_estimate=pl.CostEstimate(flops=flops,
                                      transcendentals=transcendentals,
                                      bytes_accessed=io_bytes),
    )(x, *packed)


# ---------------------------------------------------------------------------
# References + synthetic init
# ---------------------------------------------------------------------------
def init_basic_block_params(key, input_size, hidden_size):
    """One BasicBlock: 4 x (W (in,out), b, gamma, beta), PyTorch-Linear-style init."""
    dims = [(input_size, hidden_size),
            (hidden_size, hidden_size),
            (hidden_size, hidden_size),
            (hidden_size, input_size)]
    params = []
    for (fan_in, fan_out) in dims:
        key, kw, kb, kg, kbe = jax.random.split(key, 5)
        bound = 1.0 / jnp.sqrt(jnp.float32(fan_in))
        W = jax.random.uniform(kw, (fan_in, fan_out), jnp.float32, -bound, bound)
        b = jax.random.uniform(kb, (fan_out,), jnp.float32, -bound, bound)
        gamma = 1.0 + 0.1 * jax.random.normal(kg, (fan_out,), jnp.float32)
        beta = 0.1 * jax.random.normal(kbe, (fan_out,), jnp.float32)
        params.append((W, b, gamma, beta))
    return params, key


def reference_basic_block_x(x, p1, p2):
    """Faithful PyTorch forward (f32, with Linear bias, unfused training-mode BN)."""
    def block(x_in, p):
        h = x_in
        for li, (W, b, g, be) in enumerate(p):
            z = h @ W + b
            mean = jnp.mean(z, axis=0, keepdims=True)
            var = jnp.mean((z - mean) ** 2, axis=0, keepdims=True)  # biased, like PyTorch BN fwd
            y = g * (z - mean) * jax.lax.rsqrt(var + BN_EPS) + be
            h = jnp.maximum(y, 0.0) if li < 3 else y
        return jnp.maximum(h + x_in, 0.0)
    return jnp.maximum(block(x, p1) + block(x, p2) + x, 0.0)


if __name__ == "__main__":
    batch = 8
    input_size = 16
    hidden_size = 32

    key = jax.random.PRNGKey(0)
    key, kx = jax.random.split(key)
    x = jax.random.normal(kx, (batch, input_size), jnp.float32)

    params1, key = init_basic_block_params(key, input_size, hidden_size)
    params2, key = init_basic_block_params(key, input_size, hidden_size)

    # 1) f32-MXU path vs faithful PyTorch-style reference (proves bias cancellation,
    #    fused BN, single-pass variance and block-diagonal packing preserve the
    #    module's training-mode forward semantics).
    out_f32 = jax.block_until_ready(basic_block_x(x, params1, params2,
                                                  mxu_dtype=jnp.float32))
    ref_exact = jax.block_until_ready(reference_basic_block_x(x, params1, params2))
    assert out_f32.shape == (batch, input_size)
    assert jnp.allclose(out_f32, ref_exact, atol=2e-4, rtol=2e-4), \
        "f32 kernel mismatch vs faithful reference"

    # 2) bf16-MXU-operand path (default / perf path) vs a pure-JAX reference using
    #    identical math & operand dtypes.
    out_bf16 = jax.block_until_ready(basic_block_x(x, params1, params2,
                                                   mxu_dtype=jnp.bfloat16))
    packed_bf16 = pack_basic_block_x_params(params1, params2, jnp.bfloat16)
    ref_matched = jax.block_until_ready(
        _basic_block_x_compute(x, *packed_bf16,
                               mxu_dtype=jnp.bfloat16, input_size=input_size))
    assert out_bf16.shape == (batch, input_size)
    assert jnp.allclose(out_bf16, ref_matched, atol=2e-3, rtol=2e-3), \
        "bf16 kernel mismatch vs matched-precision reference"

    print("KERNEL_OK")
</pallas_src>

<mosaic_0001>
module attributes {stable_mosaic.version = 11 : i64} {
  func.func @_basic_block_x_kernel(%arg0: memref<8x16xf32, #tpu.memory_space<vmem>>, %arg1: memref<16x64xf32, #tpu.memory_space<vmem>>, %arg2: memref<64x64xf32, #tpu.memory_space<vmem>>, %arg3: memref<64x64xf32, #tpu.memory_space<vmem>>, %arg4: memref<64x32xf32, #tpu.memory_space<vmem>>, %arg5: memref<2x224xf32, #tpu.memory_space<vmem>>, %arg6: memref<8x16xf32, #tpu.memory_space<vmem>>) attributes {dimension_semantics = [], scalar_prefetch = 0 : i64, scratch_operands = 0 : i64, tpu.core_type = #tpu.core_type<tc>} {
    %c0 = arith.constant 0 : index
    %c0_0 = arith.constant 0 : index
    %0 = vector.load %arg0[%c0, %c0_0] : memref<8x16xf32, #tpu.memory_space<vmem>>, vector<8x16xf32>
    %c0_1 = arith.constant 0 : index
    %c0_2 = arith.constant 0 : index
    %1 = vector.load %arg5[%c0_1, %c0_2] : memref<2x224xf32, #tpu.memory_space<vmem>>, vector<2x224xf32>
    %2 = vector.extract_strided_slice %1 {offsets = [0, 0], sizes = [1, 64], strides = [1, 1]} : vector<2x224xf32> to vector<1x64xf32>
    %3 = vector.extract_strided_slice %1 {offsets = [1, 0], sizes = [1, 64], strides = [1, 1]} : vector<2x224xf32> to vector<1x64xf32>
    %c0_3 = arith.constant 0 : index
    %c0_4 = arith.constant 0 : index
    %4 = vector.load %arg1[%c0_3, %c0_4] : memref<16x64xf32, #tpu.memory_space<vmem>>, vector<16x64xf32>
    %cst = arith.constant dense<0.000000e+00> : vector<8x64xf32>
    %5 = tpu.matmul %0, %4, %cst {dimension_numbers = #tpu.dot_dimension_numbers<[1], [0], [0], [1], [0, 0, 1, 1], [], []>} : vector<8x16xf32>, vector<16x64xf32>, vector<8x64xf32> -> vector<8x64xf32>
    %cst_5 = arith.constant dense<0.000000e+00> : vector<64xf32>
    %6 = vector.multi_reduction <add>, %5, %cst_5 [0] : vector<8x64xf32> to vector<64xf32>
    %7 = vector.shape_cast %6 : vector<64xf32> to vector<1x64xf32>
    %cst_6 = arith.constant 8.000000e+00 : f32
    %8 = vector.broadcast %cst_6 : f32 to vector<1x64xf32>
    %9 = arith.divf %7, %8 : vector<1x64xf32>
    %10 = arith.mulf %5, %5 : vector<8x64xf32>
    %cst_7 = arith.constant dense<0.000000e+00> : vector<64xf32>
    %11 = vector.multi_reduction <add>, %10, %cst_7 [0] : vector<8x64xf32> to vector<64xf32>
    %12 = vector.shape_cast %11 : vector<64xf32> to vector<1x64xf32>
    %cst_8 = arith.constant 8.000000e+00 : f32
    %13 = vector.broadcast %cst_8 : f32 to vector<1x64xf32>
    %14 = arith.divf %12, %13 : vector<1x64xf32>
    %15 = arith.mulf %9, %9 : vector<1x64xf32>
    %16 = arith.subf %14, %15 : vector<1x64xf32>
    %cst_9 = arith.constant 0.000000e+00 : f32
    %17 = vector.broadcast %cst_9 : f32 to vector<1x64xf32>
    %18 = arith.maximumf %16, %17 : vector<1x64xf32>
    %cst_10 = arith.constant 9.99999974E-6 : f32
    %19 = vector.broadcast %cst_10 : f32 to vector<1x64xf32>
    %20 = arith.addf %18, %19 : vector<1x64xf32>
    %21 = math.rsqrt %20 : vector<1x64xf32>
    %22 = arith.mulf %2, %21 : vector<1x64xf32>
    %23 = arith.mulf %9, %22 : vector<1x64xf32>
    %24 = arith.subf %3, %23 : vector<1x64xf32>
    %25 = vector.broadcast %22 : vector<1x64xf32> to vector<8x64xf32>
    %26 = arith.mulf %5, %25 : vector<8x64xf32>
    %27 = vector.broadcast %24 : vector<1x64xf32> to vector<8x64xf32>
    %28 = arith.addf %26, %27 : vector<8x64xf32>
    %cst_11 = arith.constant 0.000000e+00 : f32
    %29 = vector.broadcast %cst_11 : f32 to vector<8x64xf32>
    %30 = arith.maximumf %28, %29 : vector<8x64xf32>
    %31 = vector.extract_strided_slice %1 {offsets = [0, 64], sizes = [1, 64], strides = [1, 1]} : vector<2x224xf32> to vector<1x64xf32>
    %32 = vector.extract_strided_slice %1 {offsets = [1, 64], sizes = [1, 64], strides = [1, 1]} : vector<2x224xf32> to vector<1x64xf32>
    %c0_12 = arith.constant 0 : index
    %c0_13 = arith.constant 0 : index
    %33 = vector.load %arg2[%c0_12, %c0_13] : memref<64x64xf32, #tpu.memory_space<vmem>>, vector<64x64xf32>
    %cst_14 = arith.constant dense<0.000000e+00> : vector<8x64xf32>
    %34 = tpu.matmul %30, %33, %cst_14 {dimension_numbers = #tpu.dot_dimension_numbers<[1], [0], [0], [1], [0, 0, 1, 1], [], []>} : vector<8x64xf32>, vector<64x64xf32>, vector<8x64xf32> -> vector<8x64xf32>
    %cst_15 = arith.constant dense<0.000000e+00> : vector<64xf32>
    %35 = vector.multi_reduction <add>, %34, %cst_15 [0] : vector<8x64xf32> to vector<64xf32>
    %36 = vector.shape_cast %35 : vector<64xf32> to vector<1x64xf32>
    %cst_16 = arith.constant 8.000000e+00 : f32
    %37 = vector.broadcast %cst_16 : f32 to vector<1x64xf32>
    %38 = arith.divf %36, %37 : vector<1x64xf32>
    %39 = arith.mulf %34, %34 : vector<8x64xf32>
    %cst_17 = arith.constant dense<0.000000e+00> : vector<64xf32>
    %40 = vector.multi_reduction <add>, %39, %cst_17 [0] : vector<8x64xf32> to vector<64xf32>
    %41 = vector.shape_cast %40 : vector<64xf32> to vector<1x64xf32>
    %cst_18 = arith.constant 8.000000e+00 : f32
    %42 = vector.broadcast %cst_18 : f32 to vector<1x64xf32>
    %43 = arith.divf %41, %42 : vector<1x64xf32>
    %44 = arith.mulf %38, %38 : vector<1x64xf32>
    %45 = arith.subf %43, %44 : vector<1x64xf32>
    %cst_19 = arith.constant 0.000000e+00 : f32
    %46 = vector.broadcast %cst_19 : f32 to vector<1x64xf32>
    %47 = arith.maximumf %45, %46 : vector<1x64xf32>
    %cst_20 = arith.constant 9.99999974E-6 : f32
    %48 = vector.broadcast %cst_20 : f32 to vector<1x64xf32>
    %49 = arith.addf %47, %48 : vector<1x64xf32>
    %50 = math.rsqrt %49 : vector<1x64xf32>
    %51 = arith.mulf %31, %50 : vector<1x64xf32>
    %52 = arith.mulf %38, %51 : vector<1x64xf32>
    %53 = arith.subf %32, %52 : vector<1x64xf32>
    %54 = vector.broadcast %51 : vector<1x64xf32> to vector<8x64xf32>
    %55 = arith.mulf %34, %54 : vector<8x64xf32>
    %56 = vector.broadcast %53 : vector<1x64xf32> to vector<8x64xf32>
    %57 = arith.addf %55, %56 : vector<8x64xf32>
    %cst_21 = arith.constant 0.000000e+00 : f32
    %58 = vector.broadcast %cst_21 : f32 to vector<8x64xf32>
    %59 = arith.maximumf %57, %58 : vector<8x64xf32>
    %60 = vector.extract_strided_slice %1 {offsets = [0, 128], sizes = [1, 64], strides = [1, 1]} : vector<2x224xf32> to vector<1x64xf32>
    %61 = vector.extract_strided_slice %1 {offsets = [1, 128], sizes = [1, 64], strides = [1, 1]} : vector<2x224xf32> to vector<1x64xf32>
    %c0_22 = arith.constant 0 : index
    %c0_23 = arith.constant 0 : index
    %62 = vector.load %arg3[%c0_22, %c0_23] : memref<64x64xf32, #tpu.memory_space<vmem>>, vector<64x64xf32>
    %cst_24 = arith.constant dense<0.000000e+00> : vector<8x64xf32>
    %63 = tpu.matmul %59, %62, %cst_24 {dimension_numbers = #tpu.dot_dimension_numbers<[1], [0], [0], [1], [0, 0, 1, 1], [], []>} : vector<8x64xf32>, vector<64x64xf32>, vector<8x64xf32> -> vector<8x64xf32>
    %cst_25 = arith.constant dense<0.000000e+00> : vector<64xf32>
    %64 = vector.multi_reduction <add>, %63, %cst_25 [0] : vector<8x64xf32> to vector<64xf32>
    %65 = vector.shape_cast %64 : vector<64xf32> to vector<1x64xf32>
    %cst_26 = arith.constant 8.000000e+00 : f32
    %66 = vector.broadcast %cst_26 : f32 to vector<1x64xf32>
    %67 = arith.divf %65, %66 : vector<1x64xf32>
    %68 = arith.mulf %63, %63 : vector<8x64xf32>
    %cst_27 = arith.constant dense<0.000000e+00> : vector<64xf32>
    %69 = vector.multi_reduction <add>, %68, %cst_27 [0] : vector<8x64xf32> to vector<64xf32>
    %70 = vector.shape_cast %69 : vector<64xf32> to vector<1x64xf32>
    %cst_28 = arith.constant 8.000000e+00 : f32
    %71 = vector.broadcast %cst_28 : f32 to vector<1x64xf32>
    %72 = arith.divf %70, %71 : vector<1x64xf32>
    %73 = arith.mulf %67, %67 : vector<1x64xf32>
    %74 = arith.subf %72, %73 : vector<1x64xf32>
    %cst_29 = arith.constant 0.000000e+00 : f32
    %75 = vector.broadcast %cst_29 : f32 to vector<1x64xf32>
    %76 = arith.maximumf %74, %75 : vector<1x64xf32>
    %cst_30 = arith.constant 9.99999974E-6 : f32
    %77 = vector.broadcast %cst_30 : f32 to vector<1x64xf32>
    %78 = arith.addf %76, %77 : vector<1x64xf32>
    %79 = math.rsqrt %78 : vector<1x64xf32>
    %80 = arith.mulf %60, %79 : vector<1x64xf32>
    %81 = arith.mulf %67, %80 : vector<1x64xf32>
    %82 = arith.subf %61, %81 : vector<1x64xf32>
    %83 = vector.broadcast %80 : vector<1x64xf32> to vector<8x64xf32>
    %84 = arith.mulf %63, %83 : vector<8x64xf32>
    %85 = vector.broadcast %82 : vector<1x64xf32> to vector<8x64xf32>
    %86 = arith.addf %84, %85 : vector<8x64xf32>
    %cst_31 = arith.constant 0.000000e+00 : f32
    %87 = vector.broadcast %cst_31 : f32 to vector<8x64xf32>
    %88 = arith.maximumf %86, %87 : vector<8x64xf32>
    %89 = vector.extract_strided_slice %1 {offsets = [0, 192], sizes = [1, 32], strides = [1, 1]} : vector<2x224xf32> to vector<1x32xf32>
    %90 = vector.extract_strided_slice %1 {offsets = [1, 192], sizes = [1, 32], strides = [1, 1]} : vector<2x224xf32> to vector<1x32xf32>
    %c0_32 = arith.constant 0 : index
    %c0_33 = arith.constant 0 : index
    %91 = vector.load %arg4[%c0_32, %c0_33] : memref<64x32xf32, #tpu.memory_space<vmem>>, vector<64x32xf32>
    %cst_34 = arith.constant dense<0.000000e+00> : vector<8x32xf32>
    %92 = tpu.matmul %88, %91, %cst_34 {dimension_numbers = #tpu.dot_dimension_numbers<[1], [0], [0], [1], [0, 0, 1, 1], [], []>} : vector<8x64xf32>, vector<64x32xf32>, vector<8x32xf32> -> vector<8x32xf32>
    %cst_35 = arith.constant dense<0.000000e+00> : vector<32xf32>
    %93 = vector.multi_reduction <add>, %92, %cst_35 [0] : vector<8x32xf32> to vector<32xf32>
    %94 = vector.shape_cast %93 : vector<32xf32> to vector<1x32xf32>
    %cst_36 = arith.constant 8.000000e+00 : f32
    %95 = vector.broadcast %cst_36 : f32 to vector<1x32xf32>
    %96 = arith.divf %94, %95 : vector<1x32xf32>
    %97 = arith.mulf %92, %92 : vector<8x32xf32>
    %cst_37 = arith.constant dense<0.000000e+00> : vector<32xf32>
    %98 = vector.multi_reduction <add>, %97, %cst_37 [0] : vector<8x32xf32> to vector<32xf32>
    %99 = vector.shape_cast %98 : vector<32xf32> to vector<1x32xf32>
    %cst_38 = arith.constant 8.000000e+00 : f32
    %100 = vector.broadcast %cst_38 : f32 to vector<1x32xf32>
    %101 = arith.divf %99, %100 : vector<1x32xf32>
    %102 = arith.mulf %96, %96 : vector<1x32xf32>
    %103 = arith.subf %101, %102 : vector<1x32xf32>
    %cst_39 = arith.constant 0.000000e+00 : f32
    %104 = vector.broadcast %cst_39 : f32 to vector<1x32xf32>
    %105 = arith.maximumf %103, %104 : vector<1x32xf32>
    %cst_40 = arith.constant 9.99999974E-6 : f32
    %106 = vector.broadcast %cst_40 : f32 to vector<1x32xf32>
    %107 = arith.addf %105, %106 : vector<1x32xf32>
    %108 = math.rsqrt %107 : vector<1x32xf32>
    %109 = arith.mulf %89, %108 : vector<1x32xf32>
    %110 = arith.mulf %96, %109 : vector<1x32xf32>
    %111 = arith.subf %90, %110 : vector<1x32xf32>
    %112 = vector.broadcast %109 : vector<1x32xf32> to vector<8x32xf32>
    %113 = arith.mulf %92, %112 : vector<8x32xf32>
    %114 = vector.broadcast %111 : vector<1x32xf32> to vector<8x32xf32>
    %115 = arith.addf %113, %114 : vector<8x32xf32>
    %116 = vector.extract_strided_slice %115 {offsets = [0, 0], sizes = [8, 16], strides = [1, 1]} : vector<8x32xf32> to vector<8x16xf32>
    %117 = arith.addf %116, %0 : vector<8x16xf32>
    %cst_41 = arith.constant 0.000000e+00 : f32
    %118 = vector.broadcast %cst_41 : f32 to vector<8x16xf32>
    %119 = arith.maximumf %117, %118 : vector<8x16xf32>
    %120 = vector.extract_strided_slice %115 {offsets = [0, 16], sizes = [8, 16], strides = [1, 1]} : vector<8x32xf32> to vector<8x16xf32>
    %121 = arith.addf %120, %0 : vector<8x16xf32>
    %cst_42 = arith.constant 0.000000e+00 : f32
    %122 = vector.broadcast %cst_42 : f32 to vector<8x16xf32>
    %123 = arith.maximumf %121, %122 : vector<8x16xf32>
    %124 = arith.addf %119, %123 : vector<8x16xf32>
    %125 = arith.addf %124, %0 : vector<8x16xf32>
    %cst_43 = arith.constant 0.000000e+00 : f32
    %126 = vector.broadcast %cst_43 : f32 to vector<8x16xf32>
    %127 = arith.maximumf %125, %126 : vector<8x16xf32>
    %c0_44 = arith.constant 0 : index
    %c0_45 = arith.constant 0 : index
    %128 = vector.load %arg6[%c0_44, %c0_45] : memref<8x16xf32, #tpu.memory_space<vmem>>, vector<8x16xf32>
    tpu.vector_store %arg6[%c0_44, %c0_45], %127 {strides = array<i32>} : memref<8x16xf32, #tpu.memory_space<vmem>>, vector<8x16xf32>,
    return
  }
}

</mosaic_0001>

<llo_original>
// kernel: tpu_custom_call.1
$region0: #{tpu_custom_call.1}
  #allocation0 [shape = 'u32[]', space=smem, size = 0x4, offset = 0x4, fixed_abs, tag = 'smem constant byte address 0x4 - core index']
  #allocation1 [shape = 'u32[144,128]{1,0:T(1,128)}', space=vmem, size = 0x12000, scoped, tag = 'internal scratch']
  %s0 = inlined_call_operand.vmem [shape: f32[8,16], index: 0, kind: input, shape index: {}]
  %s1 = inlined_call_operand.vmem [shape: f32[16,64], index: 1, kind: input, shape index: {}]
  %s2 = inlined_call_operand.vmem [shape: f32[64,64], index: 2, kind: input, shape index: {}]
  %s3 = inlined_call_operand.hbm [shape: f32[64,64], index: 3, kind: input, shape index: {}]
  %s4 = inlined_call_operand.vmem [shape: f32[64,32], index: 4, kind: input, shape index: {}]
  %s5 = inlined_call_operand.vmem [shape: f32[2,224], index: 5, kind: input, shape index: {}]
  %s6 = inlined_call_operand.hbm [shape: f32[8,16], index: 6, kind: output, shape index: {}]
  %s7 = sld [smem:[#allocation0]]
  $region38: #{tpu_custom_call.1} parent=0
    _
  %s9 = ssub.s32 1, %s7
  %s10 = scalar_select 0, %s9, %s7
  $region1: #{tpu_custom_call.1} parent=0
    #allocation2 [shape = 'u8[32768]{0}', space=vmem, size = 0x8000, scoped, tag = 'input window, operand 3, single buffered']
    #allocation3 [shape = 's32[1]{0}', space=sflag, size = 0x4, scoped, tag = 'scoped memory for tpu_custom_call.1']
    #allocation4 [shape = 's32[1]{0}', space=sflag, size = 0x4, scoped, tag = 'scoped memory for tpu_custom_call.1']
    #allocation5 [shape = 'u8[4096]{0}', space=vmem, size = 0x1000, scoped, tag = 'output window, operand 0, single buffered']
    %11 = vsyncpa [#allocation3], 0
    %12 = vsyncpa [#allocation4], 0
    // Predicated region
    $region2: #{tpu_custom_call.1} parent=1 // pred_check
      _
    $region3: #{tpu_custom_call.1} parent=1 // pred_check_branch
      %14 = sbr.rel (0) target = $region5
    $region4: #{tpu_custom_call.1} parent=1 // pred_region
      _
    $region5: #{tpu_custom_call.1} parent=1 // pred_fallthru
      _
    // Predicated region
    $region6: #{tpu_custom_call.1} parent=1 // pred_check
      _
    $region7: #{tpu_custom_call.1} parent=1 // pred_check_branch
      %16 = sbr.rel (0) target = $region9
    $region8: #{tpu_custom_call.1} parent=1 // pred_region
      _
    $region9: #{tpu_custom_call.1} parent=1 // pred_fallthru
      _
    // Predicated region
    $region10: #{tpu_custom_call.1} parent=1 // pred_check
      _
    $region11: #{tpu_custom_call.1} parent=1 // pred_check_branch
      %18 = sbr.rel (0) target = $region13
    $region12: #{tpu_custom_call.1} parent=1 // pred_region
      _
    $region13: #{tpu_custom_call.1} parent=1 // pred_fallthru
      _
    // Predicated region
    $region14: #{tpu_custom_call.1} parent=1 // pred_check
      _
    $region15: #{tpu_custom_call.1} parent=1 // pred_check_branch
      %20 = sbr.rel (0) target = $region17
    $region16: #{tpu_custom_call.1} parent=1 // pred_region
      %s22 = ssub.s32 1024, 1024
      %23 = vsyncadd [#allocation3], %s22
      %s24 = sshll.u32 [#allocation2], 4
      %s25 = int_to_ptr.vmem [resolvable:$true] %s24
      %30 = dma.hbm_to_vmem [thread:$0]  %s3, 1024, %s25, [#allocation3], 128, 128, 8
    $region17: #{tpu_custom_call.1} parent=1 // pred_fallthru
      _
    // Predicated region
    $region18: #{tpu_custom_call.1} parent=1 // pred_check
      _
    $region19: #{tpu_custom_call.1} parent=1 // pred_check_branch
      %32 = sbr.rel (0) target = $region21
    $region20: #{tpu_custom_call.1} parent=1 // pred_region
      _
    $region21: #{tpu_custom_call.1} parent=1 // pred_fallthru
      _
    // Predicated region
    $region22: #{tpu_custom_call.1} parent=1 // pred_check
      _
    $region23: #{tpu_custom_call.1} parent=1 // pred_check_branch
      %34 = sbr.rel (0) target = $region25
    $region24: #{tpu_custom_call.1} parent=1 // pred_region
      _
    $region25: #{tpu_custom_call.1} parent=1 // pred_fallthru
      _
    // Predicated region
    $region26: #{tpu_custom_call.1} parent=1 // pred_check
      _
    $region27: #{tpu_custom_call.1} parent=1 // pred_check_branch
      %36 = sbr.rel (0) target = $region29
    $region28: #{tpu_custom_call.1} parent=1 // pred_region
      %37 = dma.done [#allocation3], 1024
    $region29: #{tpu_custom_call.1} parent=1 // pred_fallthru
      _
    %v38 = vld [vmem:[%s0] sm:$0xff]
    %v39 = vld [vmem:[%s5] sm:$0xf]
    %v40 = vld [vmem:[%s1] sm:$0xff]
    %v41 = vld [vmem:[%s1 + $0x8] sm:$0xff]
    %vm42 = vcmask 130048
    %v44 = vsel %vm42, %v38, 0
    %46 = vmatprep.subr.mxu0 0.0
    %47 = vmatpush1.msra.mxu0 0.0
    %48 = vmatprep.subr.mxu0 0.0
    %49 = vmatpush1.msra.mxu0 0.0
    %50 = vmatprep.subr.mxu0 0.0
    %51 = vmatpush1.msra.mxu0 0.0
    %52 = vmatprep.subr.mxu0 0.0
    %53 = vmatpush1.msra.mxu0 0.0
    %54 = vmatprep.subr.mxu0 0.0
    %55 = vmatpush1.msra.mxu0 0.0
    %56 = vmatprep.subr.mxu0 0.0
    %57 = vmatpush1.msra.mxu0 0.0
    %58 = vmatprep.subr.mxu0 0.0
    %59 = vmatpush1.msra.mxu0 0.0
    %60 = vmatprep.subr.mxu0 0.0
    %61 = vmatpush1.msra.mxu0 0.0
    %62 = vmatprep.subr.mxu0 0.0
    %63 = vmatpush1.msra.mxu0 0.0
    %64 = vmatprep.subr.mxu0 0.0
    %65 = vmatpush1.msra.mxu0 0.0
    %66 = vmatprep.subr.mxu0 0.0
    %67 = vmatpush1.msra.mxu0 0.0
    %68 = vmatprep.subr.mxu0 0.0
    %69 = vmatpush1.msra.mxu0 0.0
    %70 = vmatprep.subr.mxu0 0.0
    %71 = vmatpush1.msra.mxu0 0.0
    %72 = vmatprep.subr.mxu0 0.0
    %73 = vmatpush1.msra.mxu0 0.0
    %74 = vmatprep.subr.mxu0 0.0
    %75 = vmatpush1.msra.mxu0 %v41
    %76 = vmatprep.subr.mxu0 0.0
    %77 = vmatpush1.msra.mxu0 %v40
    %78 = vmatprep.subr.mxu0 0.0
    %79 = vmatpush2.msra.mxu0 0.0
    %80 = vmatprep.subr.mxu0 0.0
    %81 = vmatpush2.msra.mxu0 0.0
    %82 = vmatprep.subr.mxu0 0.0
    %83 = vmatpush2.msra.mxu0 0.0
    %84 = vmatprep.subr.mxu0 0.0
    %85 = vmatpush2.msra.mxu0 0.0
    %86 = vmatprep.subr.mxu0 0.0
    %87 = vmatpush2.msra.mxu0 0.0
    %88 = vmatprep.subr.mxu0 0.0
    %89 = vmatpush2.msra.mxu0 0.0
    %90 = vmatprep.subr.mxu0 0.0
    %91 = vmatpush2.msra.mxu0 0.0
    %92 = vmatprep.subr.mxu0 0.0
    %93 = vmatpush2.msra.mxu0 0.0
    %94 = vmatprep.subr.mxu0 0.0
    %95 = vmatpush2.msra.mxu0 0.0
    %96 = vmatprep.subr.mxu0 0.0
    %97 = vmatpush2.msra.mxu0 0.0
    %98 = vmatprep.subr.mxu0 0.0
    %99 = vmatpush2.msra.mxu0 0.0
    %100 = vmatprep.subr.mxu0 0.0
    %101 = vmatpush2.msra.mxu0 0.0
    %102 = vmatprep.subr.mxu0 0.0
    %103 = vmatpush2.msra.mxu0 0.0
    %104 = vmatprep.subr.mxu0 0.0
    %105 = vmatpush2.msra.mxu0 0.0
    %106 = vmatprep.subr.mxu0 0.0
    %107 = vmatpush2.msra.mxu0 0.0
    %108 = vmatprep.subr.mxu0 0.0
    %109 = vmatpush2.msra.mxu0 0.0
    %110 = vmatprep.mubr.f32.mxu0 0.0
    %111 = vmatmul.mubr.f32.gmra.mxu0 %v44
    %v112 = vpop.f32.mrf.mxu0
    %v113 = vadd.f32 0.0, %v112
    %v114 = vpop.f32.mrf.mxu0
    %115 = vdwg.mxu0
    %vm116 = vcmask 523264
    %v117 = vsel %vm116, %v113, 0.0
    %v118 = vrot.slane %v117, 4
    %v119 = vadd.f32 %v117, %v118
    %v120 = vrot.slane %v119, 2
    %v121 = vadd.f32 %v119, %v120
    %v122 = vrot.slane %v121, 1
    %v123 = vadd.f32 %v121, %v122
    %v124 = vrcp.pop 8.0
    %v125 = vmul.f32 %v123, %v124
    %v126 = vmul.f32 %v113, %v113
    %v127 = vsel %vm116, %v126, 0.0
    %v128 = vrot.slane %v127, 4
    %v129 = vadd.f32 %v127, %v128
    %v130 = vrot.slane %v129, 2
    %v131 = vadd.f32 %v129, %v130
    %v132 = vrot.slane %v131, 1
    %v133 = vadd.f32 %v131, %v132
    %v134 = vmul.f32 %v133, %v124
    %v135 = vmul.f32 %v125, %v125
    %v136 = vsub.f32 %v134, %v135
    %v137 = vmax.f32 %v136, 0.0
    %v138 = vadd.f32 %v137, 1e-05
    %v139 = vrsqrt.pop %v138
    %v140 = vmul.f32 %v39, %v139
    %v141 = vmul.f32 %v125, %v140
    %v144 = vunpack.c.l.s4 1983009808
    %v145 = vunpack.c.0.s8 %v144
    %v146 = vlaneseq
    %v147 = vshrl.u32 %v146, 7
    %v148 = vsub.s32 %v145, %v147
    %v149 = vrot.slane %v141, %v148
    %v150 = vrot.slane %v149, 7
    %v152 = vsub.f32 %v39, %v150
    %v153 = vlaneseq
    %v154 = vshrl.u32 %v153, 7
    %v155 = vsub.s32 0, %v154
    %v156 = vrot.slane %v140, %v155
    %v157 = vmul.f32 %v113, %v156
    %v158 = vlaneseq
    %v159 = vshrl.u32 %v158, 7
    %v160 = vsub.s32 1, %v159
    %v161 = vrot.slane %v152, %v160
    %v162 = vadd.f32 %v157, %v161
    %v163 = vmax.f32 %v162, 0.0
    %v164 = vld [vmem:[%s2] sm:$0xff]
    %v165 = vld [vmem:[%s2 + $0x8] sm:$0xff]
    %v166 = vld [vmem:[%s2 + $0x10] sm:$0xff]
    %v167 = vld [vmem:[%s2 + $0x18] sm:$0xff]
    %v168 = vld [vmem:[%s2 + $0x20] sm:$0xff]
    %v169 = vld [vmem:[%s2 + $0x28] sm:$0xff]
    %v170 = vld [vmem:[%s2 + $0x30] sm:$0xff]
    %v171 = vld [vmem:[%s2 + $0x38] sm:$0xff]
    %v173 = vsel %vm116, %v163, 0
    %175 = vmatprep.subr.mxu0 0.0
    %176 = vmatpush1.msra.mxu0 0.0
    %177 = vmatprep.subr.mxu0 0.0
    %178 = vmatpush1.msra.mxu0 0.0
    %179 = vmatprep.subr.mxu0 0.0
    %180 = vmatpush1.msra.mxu0 0.0
    %181 = vmatprep.subr.mxu0 0.0
    %182 = vmatpush1.msra.mxu0 0.0
    %183 = vmatprep.subr.mxu0 0.0
    %184 = vmatpush1.msra.mxu0 0.0
    %185 = vmatprep.subr.mxu0 0.0
    %186 = vmatpush1.msra.mxu0 0.0
    %187 = vmatprep.subr.mxu0 0.0
    %188 = vmatpush1.msra.mxu0 0.0
    %189 = vmatprep.subr.mxu0 0.0
    %190 = vmatpush1.msra.mxu0 0.0
    %191 = vmatprep.subr.mxu0 0.0
    %192 = vmatpush1.msra.mxu0 %v171
    %193 = vmatprep.subr.mxu0 0.0
    %194 = vmatpush1.msra.mxu0 %v170
    %195 = vmatprep.subr.mxu0 0.0
    %196 = vmatpush1.msra.mxu0 %v169
    %197 = vmatprep.subr.mxu0 0.0
    %198 = vmatpush1.msra.mxu0 %v168
    %199 = vmatprep.subr.mxu0 0.0
    %200 = vmatpush1.msra.mxu0 %v167
    %201 = vmatprep.subr.mxu0 0.0
    %202 = vmatpush1.msra.mxu0 %v166
    %203 = vmatprep.subr.mxu0 0.0
    %204 = vmatpush1.msra.mxu0 %v165
    %205 = vmatprep.subr.mxu0 0.0
    %206 = vmatpush1.msra.mxu0 %v164
    %207 = vmatprep.subr.mxu0 0.0
    %208 = vmatpush2.msra.mxu0 0.0
    %209 = vmatprep.subr.mxu0 0.0
    %210 = vmatpush2.msra.mxu0 0.0
    %211 = vmatprep.subr.mxu0 0.0
    %212 = vmatpush2.msra.mxu0 0.0
    %213 = vmatprep.subr.mxu0 0.0
    %214 = vmatpush2.msra.mxu0 0.0
    %215 = vmatprep.subr.mxu0 0.0
    %216 = vmatpush2.msra.mxu0 0.0
    %217 = vmatprep.subr.mxu0 0.0
    %218 = vmatpush2.msra.mxu0 0.0
    %219 = vmatprep.subr.mxu0 0.0
    %220 = vmatpush2.msra.mxu0 0.0
    %221 = vmatprep.subr.mxu0 0.0
    %222 = vmatpush2.msra.mxu0 0.0
    %223 = vmatprep.subr.mxu0 0.0
    %224 = vmatpush2.msra.mxu0 0.0
    %225 = vmatprep.subr.mxu0 0.0
    %226 = vmatpush2.msra.mxu0 0.0
    %227 = vmatprep.subr.mxu0 0.0
    %228 = vmatpush2.msra.mxu0 0.0
    %229 = vmatprep.subr.mxu0 0.0
    %230 = vmatpush2.msra.mxu0 0.0
    %231 = vmatprep.subr.mxu0 0.0
    %232 = vmatpush2.msra.mxu0 0.0
    %233 = vmatprep.subr.mxu0 0.0
    %234 = vmatpush2.msra.mxu0 0.0
    %235 = vmatprep.subr.mxu0 0.0
    %236 = vmatpush2.msra.mxu0 0.0
    %237 = vmatprep.subr.mxu0 0.0
    %238 = vmatpush2.msra.mxu0 0.0
    %239 = vmatprep.mubr.f32.mxu0 0.0
    %240 = vmatmul.mubr.f32.gmra.mxu0 %v173
    %v241 = vpop.f32.mrf.mxu0
    %v242 = vadd.f32 0.0, %v241
    %v243 = vpop.f32.mrf.mxu0
    %244 = vdwg.mxu0
    %v245 = vsel %vm116, %v242, 0.0
    %v246 = vrot.slane %v245, 4
    %v247 = vadd.f32 %v245, %v246
    %v248 = vrot.slane %v247, 2
    %v249 = vadd.f32 %v247, %v248
    %v250 = vrot.slane %v249, 1
    %v251 = vadd.f32 %v249, %v250
    %v252 = vmul.f32 %v251, %v124
    %v253 = vmul.f32 %v242, %v242
    %v254 = vsel %vm116, %v253, 0.0
    %v255 = vrot.slane %v254, 4
    %v256 = vadd.f32 %v254, %v255
    %v257 = vrot.slane %v256, 2
    %v258 = vadd.f32 %v256, %v257
    %v259 = vrot.slane %v258, 1
    %v260 = vadd.f32 %v258, %v259
    %v261 = vmul.f32 %v260, %v124
    %v262 = vmul.f32 %v252, %v252
    %v263 = vsub.f32 %v261, %v262
    %v264 = vmax.f32 %v263, 0.0
    %v265 = vadd.f32 %v264, 1e-05
    %v266 = vrsqrt.pop %v265
    %v269 = vunpack.c.l.s4 1983009808
    %v270 = vunpack.c.0.s8 %v269
    %v271 = vlaneseq
    %v272 = vshrl.u32 %v271, 7
    %v273 = vsub.s32 %v270, %v272
    %v274 = vrot.slane %v266, %v273
    %275 = vrot.lane.b32.xlu0 %v274, 64
    %v276 = vpop.permute.xlu0 %275
    %v278 = vmul.f32 %v39, %v276
    %v280 = vlaneseq
    %v281 = vshrl.u32 %v280, 7
    %v282 = vsub.s32 0, %v281
    %v283 = vrot.slane %v278, %v282
    %284 = vrot.lane.b32.xlu0 %v283, 64
    %v285 = vpop.permute.xlu0 %284
    %v287 = vmul.f32 %v252, %v285
    %v290 = vunpack.c.l.s4 1983009808
    %v291 = vunpack.c.0.s8 %v290
    %v292 = vlaneseq
    %v293 = vshrl.u32 %v292, 7
    %v294 = vsub.s32 %v291, %v293
    %v295 = vrot.slane %v287, %v294
    %v296 = vrot.slane %v295, 7
    %297 = vrot.lane.b32.xlu0 %v296, 64
    %v298 = vpop.permute.xlu0 %297
    %v300 = vsub.f32 %v39, %v298
    %v301 = vlaneseq
    %v302 = vshrl.u32 %v301, 7
    %v303 = vsub.s32 0, %v302
    %v304 = vrot.slane %v278, %v303
    %306 = vrot.lane.b32.xlu0 %v304, 64
    %v307 = vpop.permute.xlu0 %306
    %v309 = vmul.f32 %v242, %v307
    %v310 = vlaneseq
    %v311 = vshrl.u32 %v310, 7
    %v312 = vsub.s32 1, %v311
    %v313 = vrot.slane %v300, %v312
    %315 = vrot.lane.b32.xlu0 %v313, 64
    %v316 = vpop.permute.xlu0 %315
    %v318 = vadd.f32 %v309, %v316
    %v319 = vmax.f32 %v318, 0.0
    %v320 = vld [vmem:[#allocation2] sm:$0xff]
    %v321 = vld [vmem:[#allocation2 + $0x8] sm:$0xff]
    %v322 = vld [vmem:[#allocation2 + $0x10] sm:$0xff]
    %v323 = vld [vmem:[#allocation2 + $0x18] sm:$0xff]
    %v324 = vld [vmem:[#allocation2 + $0x20] sm:$0xff]
    %v325 = vld [vmem:[#allocation2 + $0x28] sm:$0xff]
    %v326 = vld [vmem:[#allocation2 + $0x30] sm:$0xff]
    %v327 = vld [vmem:[#allocation2 + $0x38] sm:$0xff]
    %v329 = vsel %vm116, %v319, 0
    %331 = vmatprep.subr.mxu0 0.0
    %332 = vmatpush1.msra.mxu0 0.0
    %333 = vmatprep.subr.mxu0 0.0
    %334 = vmatpush1.msra.mxu0 0.0
    %335 = vmatprep.subr.mxu0 0.0
    %336 = vmatpush1.msra.mxu0 0.0
    %337 = vmatprep.subr.mxu0 0.0
    %338 = vmatpush1.msra.mxu0 0.0
    %339 = vmatprep.subr.mxu0 0.0
    %340 = vmatpush1.msra.mxu0 0.0
    %341 = vmatprep.subr.mxu0 0.0
    %342 = vmatpush1.msra.mxu0 0.0
    %343 = vmatprep.subr.mxu0 0.0
    %344 = vmatpush1.msra.mxu0 0.0
    %345 = vmatprep.subr.mxu0 0.0
    %346 = vmatpush1.msra.mxu0 0.0
    %347 = vmatprep.subr.mxu0 0.0
    %348 = vmatpush1.msra.mxu0 %v327
    %349 = vmatprep.subr.mxu0 0.0
    %350 = vmatpush1.msra.mxu0 %v326
    %351 = vmatprep.subr.mxu0 0.0
    %352 = vmatpush1.msra.mxu0 %v325
    %353 = vmatprep.subr.mxu0 0.0
    %354 = vmatpush1.msra.mxu0 %v324
    %355 = vmatprep.subr.mxu0 0.0
    %356 = vmatpush1.msra.mxu0 %v323
    %357 = vmatprep.subr.mxu0 0.0
    %358 = vmatpush1.msra.mxu0 %v322
    %359 = vmatprep.subr.mxu0 0.0
    %360 = vmatpush1.msra.mxu0 %v321
    %361 = vmatprep.subr.mxu0 0.0
    %362 = vmatpush1.msra.mxu0 %v320
    %363 = vmatprep.subr.mxu0 0.0
    %364 = vmatpush2.msra.mxu0 0.0
    %365 = vmatprep.subr.mxu0 0.0
    %366 = vmatpush2.msra.mxu0 0.0
    %367 = vmatprep.subr.mxu0 0.0
    %368 = vmatpush2.msra.mxu0 0.0
    %369 = vmatprep.subr.mxu0 0.0
    %370 = vmatpush2.msra.mxu0 0.0
    %371 = vmatprep.subr.mxu0 0.0
    %372 = vmatpush2.msra.mxu0 0.0
    %373 = vmatprep.subr.mxu0 0.0
    %374 = vmatpush2.msra.mxu0 0.0
    %375 = vmatprep.subr.mxu0 0.0
    %376 = vmatpush2.msra.mxu0 0.0
    %377 = vmatprep.subr.mxu0 0.0
    %378 = vmatpush2.msra.mxu0 0.0
    %379 = vmatprep.subr.mxu0 0.0
    %380 = vmatpush2.msra.mxu0 0.0
    %381 = vmatprep.subr.mxu0 0.0
    %382 = vmatpush2.msra.mxu0 0.0
    %383 = vmatprep.subr.mxu0 0.0
    %384 = vmatpush2.msra.mxu0 0.0
    %385 = vmatprep.subr.mxu0 0.0
    %386 = vmatpush2.msra.mxu0 0.0
    %387 = vmatprep.subr.mxu0 0.0
    %388 = vmatpush2.msra.mxu0 0.0
    %389 = vmatprep.subr.mxu0 0.0
    %390 = vmatpush2.msra.mxu0 0.0
    %391 = vmatprep.subr.mxu0 0.0
    %392 = vmatpush2.msra.mxu0 0.0
    %393 = vmatprep.subr.mxu0 0.0
    %394 = vmatpush2.msra.mxu0 0.0
    %395 = vmatprep.mubr.f32.mxu0 0.0
    %396 = vmatmul.mubr.f32.gmra.mxu0 %v329
    %v397 = vpop.f32.mrf.mxu0
    %v398 = vadd.f32 0.0, %v397
    %v399 = vpop.f32.mrf.mxu0
    %400 = vdwg.mxu0
    %v401 = vsel %vm116, %v398, 0.0
    %v402 = vrot.slane %v401, 4
    %v403 = vadd.f32 %v401, %v402
    %v404 = vrot.slane %v403, 2
    %v405 = vadd.f32 %v403, %v404
    %v406 = vrot.slane %v405, 1
    %v407 = vadd.f32 %v405, %v406
    %v408 = vmul.f32 %v407, %v124
    %v409 = vmul.f32 %v398, %v398
    %v410 = vsel %vm116, %v409, 0.0
    %v411 = vrot.slane %v410, 4
    %v412 = vadd.f32 %v410, %v411
    %v413 = vrot.slane %v412, 2
    %v414 = vadd.f32 %v412, %v413
    %v415 = vrot.slane %v414, 1
    %v416 = vadd.f32 %v414, %v415
    %v417 = vmul.f32 %v416, %v124
    %v418 = vmul.f32 %v408, %v408
    %v419 = vsub.f32 %v417, %v418
    %v420 = vmax.f32 %v419, 0.0
    %v421 = vadd.f32 %v420, 1e-05
    %v422 = vrsqrt.pop %v421
    %v424 = vrot.slane %v39, 2
    %v426 = vmul.f32 %v424, %v422
    %v427 = vmul.f32 %v408, %v426
    %v430 = vunpack.c.l.s4 1983009808
    %v431 = vunpack.c.0.s8 %v430
    %v432 = vlaneseq
    %v433 = vshrl.u32 %v432, 7
    %v434 = vsub.s32 %v431, %v433
    %v435 = vrot.slane %v427, %v434
    %v436 = vrot.slane %v435, 7
    %v438 = vsub.f32 %v424, %v436
    %v439 = vlaneseq
    %v440 = vshrl.u32 %v439, 7
    %v441 = vsub.s32 0, %v440
    %v442 = vrot.slane %v426, %v441
    %v443 = vmul.f32 %v398, %v442
    %v444 = vlaneseq
    %v445 = vshrl.u32 %v444, 7
    %v446 = vsub.s32 1, %v445
    %v447 = vrot.slane %v438, %v446
    %v448 = vadd.f32 %v443, %v447
    %v449 = vmax.f32 %v448, 0.0
    %v450 = vld [vmem:[%s4] sm:$0xff]
    %v451 = vld [vmem:[%s4 + $0x8] sm:$0xff]
    %v452 = vld [vmem:[%s4 + $0x10] sm:$0xff]
    %v453 = vld [vmem:[%s4 + $0x18] sm:$0xff]
    %v454 = vld [vmem:[%s4 + $0x20] sm:$0xff]
    %v455 = vld [vmem:[%s4 + $0x28] sm:$0xff]
    %v456 = vld [vmem:[%s4 + $0x30] sm:$0xff]
    %v457 = vld [vmem:[%s4 + $0x38] sm:$0xff]
    %v459 = vsel %vm116, %v449, 0
    %461 = vmatprep.subr.mxu0 0.0
    %462 = vmatpush1.msra.mxu0 0.0
    %463 = vmatprep.subr.mxu0 0.0
    %464 = vmatpush1.msra.mxu0 0.0
    %465 = vmatprep.subr.mxu0 0.0
    %466 = vmatpush1.msra.mxu0 0.0
    %467 = vmatprep.subr.mxu0 0.0
    %468 = vmatpush1.msra.mxu0 0.0
    %469 = vmatprep.subr.mxu0 0.0
    %470 = vmatpush1.msra.mxu0 0.0
    %471 = vmatprep.subr.mxu0 0.0
    %472 = vmatpush1.msra.mxu0 0.0
    %473 = vmatprep.subr.mxu0 0.0
    %474 = vmatpush1.msra.mxu0 0.0
    %475 = vmatprep.subr.mxu0 0.0
    %476 = vmatpush1.msra.mxu0 0.0
    %477 = vmatprep.subr.mxu0 0.0
    %478 = vmatpush1.msra.mxu0 %v457
    %479 = vmatprep.subr.mxu0 0.0
    %480 = vmatpush1.msra.mxu0 %v456
    %481 = vmatprep.subr.mxu0 0.0
    %482 = vmatpush1.msra.mxu0 %v455
    %483 = vmatprep.subr.mxu0 0.0
    %484 = vmatpush1.msra.mxu0 %v454
    %485 = vmatprep.subr.mxu0 0.0
    %486 = vmatpush1.msra.mxu0 %v453
    %487 = vmatprep.subr.mxu0 0.0
    %488 = vmatpush1.msra.mxu0 %v452
    %489 = vmatprep.subr.mxu0 0.0
    %490 = vmatpush1.msra.mxu0 %v451
    %491 = vmatprep.subr.mxu0 0.0
    %492 = vmatpush1.msra.mxu0 %v450
    %493 = vmatprep.subr.mxu0 0.0
    %494 = vmatpush2.msra.mxu0 0.0
    %495 = vmatprep.subr.mxu0 0.0
    %496 = vmatpush2.msra.mxu0 0.0
    %497 = vmatprep.subr.mxu0 0.0
    %498 = vmatpush2.msra.mxu0 0.0
    %499 = vmatprep.subr.mxu0 0.0
    %500 = vmatpush2.msra.mxu0 0.0
    %501 = vmatprep.subr.mxu0 0.0
    %502 = vmatpush2.msra.mxu0 0.0
    %503 = vmatprep.subr.mxu0 0.0
    %504 = vmatpush2.msra.mxu0 0.0
    %505 = vmatprep.subr.mxu0 0.0
    %506 = vmatpush2.msra.mxu0 0.0
    %507 = vmatprep.subr.mxu0 0.0
    %508 = vmatpush2.msra.mxu0 0.0
    %509 = vmatprep.subr.mxu0 0.0
    %510 = vmatpush2.msra.mxu0 0.0
    %511 = vmatprep.subr.mxu0 0.0
    %512 = vmatpush2.msra.mxu0 0.0
    %513 = vmatprep.subr.mxu0 0.0
    %514 = vmatpush2.msra.mxu0 0.0
    %515 = vmatprep.subr.mxu0 0.0
    %516 = vmatpush2.msra.mxu0 0.0
    %517 = vmatprep.subr.mxu0 0.0
    %518 = vmatpush2.msra.mxu0 0.0
    %519 = vmatprep.subr.mxu0 0.0
    %520 = vmatpush2.msra.mxu0 0.0
    %521 = vmatprep.subr.mxu0 0.0
    %522 = vmatpush2.msra.mxu0 0.0
    %523 = vmatprep.subr.mxu0 0.0
    %524 = vmatpush2.msra.mxu0 0.0
    %525 = vmatprep.mubr.f32.mxu0 0.0
    %526 = vmatmul.mubr.f32.gmra.mxu0 %v459
    %v527 = vpop.f32.mrf.mxu0
    %v528 = vadd.f32 0.0, %v527
    %v529 = vpop.f32.mrf.mxu0
    %530 = vdwg.mxu0
    %vm531 = vcmask 261120
    %v532 = vsel %vm531, %v528, 0.0
    %v533 = vrot.slane %v532, 4
    %v534 = vadd.f32 %v532, %v533
    %v535 = vrot.slane %v534, 2
    %v536 = vadd.f32 %v534, %v535
    %v537 = vrot.slane %v536, 1
    %v538 = vadd.f32 %v536, %v537
    %v539 = vmul.f32 %v538, %v124
    %v540 = vmul.f32 %v528, %v528
    %v541 = vsel %vm531, %v540, 0.0
    %v542 = vrot.slane %v541, 4
    %v543 = vadd.f32 %v541, %v542
    %v544 = vrot.slane %v543, 2
    %v545 = vadd.f32 %v543, %v544
    %v546 = vrot.slane %v545, 1
    %v547 = vadd.f32 %v545, %v546
    %v548 = vmul.f32 %v547, %v124
    %v549 = vmul.f32 %v539, %v539
    %v550 = vsub.f32 %v548, %v549
    %v551 = vmax.f32 %v550, 0.0
    %v552 = vadd.f32 %v551, 1e-05
    %v553 = vrsqrt.pop %v552
    %554 = vrot.lane.b32.xlu0 %v39, 64
    %v555 = vpop.permute.xlu0 %554
    %v556 = vrot.slane %v555, 2
    %v558 = vmul.f32 %v556, %v553
    %v559 = vmul.f32 %v539, %v558
    %v562 = vunpack.c.l.s4 1983009808
    %v563 = vunpack.c.0.s8 %v562
    %v564 = vlaneseq
    %v565 = vshrl.u32 %v564, 7
    %v566 = vsub.s32 %v563, %v565
    %v567 = vrot.slane %v559, %v566
    %v568 = vrot.slane %v567, 7
    %v570 = vsub.f32 %v556, %v568
    %v571 = vlaneseq
    %v572 = vshrl.u32 %v571, 7
    %v573 = vsub.s32 0, %v572
    %v574 = vrot.slane %v558, %v573
    %v575 = vmul.f32 %v528, %v574
    %v576 = vlaneseq
    %v577 = vshrl.u32 %v576, 7
    %v578 = vsub.s32 1, %v577
    %v579 = vrot.slane %v570, %v578
    %v580 = vadd.f32 %v575, %v579
    %v581 = vadd.f32 %v580, %v38
    %v582 = vmax.f32 %v581, 0.0
    %583 = vrot.lane.b32.xlu0 %v38, 16
    %v584 = vpop.permute.xlu0 %583
    %v586 = vadd.f32 %v580, %v584
    %v587 = vmax.f32 %v586, 0.0
    %589 = vrot.lane.b32.xlu0 %v587, 112
    %v590 = vpop.permute.xlu0 %589
    %v592 = vadd.f32 %v582, %v590
    %v593 = vadd.f32 %v592, %v38
    %v594 = vmax.f32 %v593, 0.0
    %595 = vst.msk [vmem:[#allocation5] sm:$0xff] %vm42, %v594
    // Predicated region
    $region30: #{tpu_custom_call.1} parent=1 // pred_check
      _
    $region31: #{tpu_custom_call.1} parent=1 // pred_check_branch
      %597 = sbr.rel (0) target = $region33
    $region32: #{tpu_custom_call.1} parent=1 // pred_region
      %s599 = ssub.s32 128, 128
      %600 = vsyncadd [#allocation4], %s599
      %s602 = sshll.u32 [#allocation5], 4
      %s603 = int_to_ptr.vmem [resolvable:$true] %s602
      %605 = dma.vmem_to_hbm [thread:$0]  %s603, 128, %s6, [#allocation4]
    $region33: #{tpu_custom_call.1} parent=1 // pred_fallthru
      _
    // Predicated region
    $region34: #{tpu_custom_call.1} parent=1 // pred_check
      _
    $region35: #{tpu_custom_call.1} parent=1 // pred_check_branch
      %607 = sbr.rel (0) target = $region37
    $region36: #{tpu_custom_call.1} parent=1 // pred_region
      %608 = dma.done [#allocation4], 128
    $region37: #{tpu_custom_call.1} parent=1 // pred_fallthru
      _
    %609 = vsyncpa [#allocation3], 1
    %610 = vsyncpa [#allocation4], 1

</llo_original>
